<compile_context>
chip_gen: v7x
topology: tpu7x:2x2x1
jax: 0.10.0
libtpu: 0.0.40
codegen_flags: <defaults>
</compile_context>

<pallas_src>
import functools
import math

import jax
import jax.numpy as jnp
from jax.experimental import pallas as pl
from jax.experimental.pallas import tpu as pltpu


def _round_up(x, m):
    return ((x + m - 1) // m) * m


_GELU_C2 = 2.0 * math.sqrt(2.0 / math.pi)


def _gelu_tanh(x):
    # PyTorch F.gelu(..., approximate='tanh'); 0.5*(1+tanh(z)) == sigmoid(2z).
    return x * jax.nn.sigmoid(_GELU_C2 * (x + 0.044715 * (x * x * x)))


def _vmem_budget_bytes():
    cap = 64 * 1024 * 1024  # conservative default: v7x per-TensorCore VMEM
    try:
        cap = int(pltpu.get_tpu_info().vmem_capacity_bytes)
    except Exception:
        pass
    return int(cap * 0.75)  # leave ~25% headroom for compiler internal scratch


_VMEM_BUDGET = _vmem_budget_bytes()
_HEADROOM = 4 * 1024 * 1024


# --------------------------------------------------------------------------
# Kernels
# --------------------------------------------------------------------------
def _mlp_kernel_resident(x_ref, w1_ref, b1_ref, w2_ref, b2_ref, o_ref):
    """Weights/biases VMEM-resident; whole MLP fused for one row tile."""
    h = jnp.dot(x_ref[...], w1_ref[...], preferred_element_type=jnp.float32)
    h = _gelu_tanh(h + b1_ref[...].astype(jnp.float32))
    y = jnp.dot(h.astype(w2_ref.dtype), w2_ref[...],
                preferred_element_type=jnp.float32)
    o_ref[...] = (y + b2_ref[...].astype(jnp.float32)).astype(o_ref.dtype)


def _mlp_kernel_streamed(x_ref, w1_ref, b1_ref, w2_ref, b2_ref, o_ref, acc_ref):
    """W1/W2 streamed over grid axis 1; f32 accumulator in VMEM scratch."""
    k = pl.program_id(1)

    @pl.when(k == 0)
    def _():
        # Initialize the accumulator with the fc2 bias (hoisted bias add).
        acc_ref[...] = jnp.broadcast_to(
            b2_ref[...].astype(jnp.float32), acc_ref.shape)

    # fc1 partial: (tm, H) @ (H, tk) -> (tm, tk), native-dtype MXU, f32 acc.
    h = jnp.dot(x_ref[...], w1_ref[...], preferred_element_type=jnp.float32)
    # b1 is resident with shape (k_tiles, tk); take row k (sublane-dim slice).
    b1_k = b1_ref[pl.ds(k, 1), :]
    h = _gelu_tanh(h + b1_k.astype(jnp.float32))
    # fc2 partial: (tm, tk) @ (tk, H) accumulated into the f32 scratch.
    acc_ref[...] += jnp.dot(h.astype(w2_ref.dtype), w2_ref[...],
                            preferred_element_type=jnp.float32)

    @pl.when(k == pl.num_programs(1) - 1)
    def _():
        o_ref[...] = acc_ref[...].astype(o_ref.dtype)


# --------------------------------------------------------------------------
# Wrapper
# --------------------------------------------------------------------------
@functools.partial(jax.jit,
                   static_argnames=("block_m", "block_k", "weights_resident"))
def siglip_mlp(hidden_states, w1, b1, w2, b2, *, block_m=256, block_k=512,
               weights_resident=None):
    """hidden_states: (batch, seq, hidden). w1:(H,I), w2:(I,H). Returns same shape."""
    batch, seq, hidden = hidden_states.shape
    inter = w1.shape[1]
    M = batch * seq
    out_dtype = hidden_states.dtype

    xb = jnp.dtype(hidden_states.dtype).itemsize
    wb = jnp.dtype(w1.dtype).itemsize

    # ---- row tile: multiple of 8 sublanes, capped at block_m.  Ensure at
    # least two row tiles (grid axis 0 is "parallel") so both v7x TensorCores
    # get work when M allows it.
    tm = min(block_m, _round_up(M, 8))
    if M >= 16 and _round_up(M, tm) // tm < 2:
        tm = max(8, _round_up(-(-M // 2), 8))

    # ---- exact VMEM cost models (2 buffers per operand, conservative).
    def resident_bytes(tm_):
        w_bytes = 2 * wb * (hidden * inter + inter * hidden + inter + hidden)
        io_bytes = 2 * xb * tm_ * hidden * 2      # x tile + out tile
        interm = 2 * 4 * tm_ * inter              # f32 fc1/gelu activations
        return w_bytes + io_bytes + interm

    def streamed_bytes(tm_, tk_, inter_pad_):
        return (2 * xb * tm_ * hidden              # x tile
                + 2 * wb * hidden * tk_            # W1 column tile
                + 2 * wb * tk_ * hidden            # W2 row tile
                + 2 * wb * (inter_pad_ + hidden)   # resident b1, b2
                + 2 * xb * tm_ * hidden            # out tile
                + 4 * tm_ * hidden                 # f32 accumulator scratch
                + 2 * 4 * tm_ * tk_)               # f32 fc1/gelu activations

    if weights_resident is None:
        use_resident = resident_bytes(tm) + _HEADROOM <= _VMEM_BUDGET
    else:
        use_resident = bool(weights_resident)

    if not use_resident:
        # ---- intermediate tile: full dim if small, else 128-aligned; shrink
        # tk (then tm) until the working set fits the budget.
        if inter <= block_k:
            tk, inter_pad = inter, inter
        else:
            tk = block_k  # multiple of 128
            while (tk > 128 and streamed_bytes(tm, tk, _round_up(inter, tk))
                   + _HEADROOM > _VMEM_BUDGET):
                tk //= 2
            inter_pad = _round_up(inter, tk)
        while (tm > 8 and streamed_bytes(tm, tk, inter_pad)
               + _HEADROOM > _VMEM_BUDGET):
            tm = max(8, _round_up(tm // 2, 8))

    # ---- pad rows to a multiple of tm (padded rows are dropped at the end).
    m_pad = _round_up(M, tm)
    x2d = hidden_states.reshape(M, hidden)
    if m_pad != M:
        x2d = jnp.pad(x2d, ((0, m_pad - M), (0, 0)))

    b2_2d = b2.reshape(1, hidden)

    if use_resident:
        b1_2d = b1.reshape(1, inter)
        vmem_limit = int(min(_VMEM_BUDGET,
                             max(resident_bytes(tm) + _HEADROOM, 16 << 20)))
        out2d = pl.pallas_call(
            _mlp_kernel_resident,
            out_shape=jax.ShapeDtypeStruct((m_pad, hidden), out_dtype),
            grid_spec=pltpu.PrefetchScalarGridSpec(
                num_scalar_prefetch=0,
                grid=(m_pad // tm,),
                in_specs=[
                    pl.BlockSpec((tm, hidden), lambda i: (i, 0)),     # x rows
                    pl.BlockSpec((hidden, inter), lambda i: (0, 0)),  # W1 resident
                    pl.BlockSpec((1, inter), lambda i: (0, 0)),       # b1 resident
                    pl.BlockSpec((inter, hidden), lambda i: (0, 0)),  # W2 resident
                    pl.BlockSpec((1, hidden), lambda i: (0, 0)),      # b2 resident
                ],
                out_specs=pl.BlockSpec((tm, hidden), lambda i: (i, 0)),
            ),
            compiler_params=pltpu.CompilerParams(
                dimension_semantics=("parallel",),
                vmem_limit_bytes=vmem_limit),
        )(x2d, w1, b1_2d, w2, b2_2d)
    else:
        # ---- zero-pad the intermediate dim (exact: gelu(0)=0, padded W2
        # rows are 0).
        w1p, b1p, w2p = w1, b1, w2
        if inter_pad != inter:
            w1p = jnp.pad(w1, ((0, 0), (0, inter_pad - inter)))
            b1p = jnp.pad(b1, ((0, inter_pad - inter),))
            w2p = jnp.pad(w2, ((0, inter_pad - inter), (0, 0)))
        k_tiles = inter_pad // tk
        b1_2d = b1p.reshape(k_tiles, tk)   # resident; row k sliced in-kernel
        vmem_limit = int(min(
            _VMEM_BUDGET,
            max(streamed_bytes(tm, tk, inter_pad) + _HEADROOM, 16 << 20)))
        out2d = pl.pallas_call(
            _mlp_kernel_streamed,
            out_shape=jax.ShapeDtypeStruct((m_pad, hidden), out_dtype),
            grid_spec=pltpu.PrefetchScalarGridSpec(
                num_scalar_prefetch=0,
                grid=(m_pad // tm, k_tiles),
                in_specs=[
                    pl.BlockSpec((tm, hidden), lambda i, k: (i, 0)),    # x rows
                    pl.BlockSpec((hidden, tk), lambda i, k: (0, k)),    # W1 col tile
                    pl.BlockSpec((k_tiles, tk), lambda i, k: (0, 0)),   # b1 resident
                    pl.BlockSpec((tk, hidden), lambda i, k: (k, 0)),    # W2 row tile
                    pl.BlockSpec((1, hidden), lambda i, k: (0, 0)),     # b2 resident
                ],
                out_specs=pl.BlockSpec((tm, hidden), lambda i, k: (i, 0)),
                scratch_shapes=[pltpu.VMEM((tm, hidden), jnp.float32)],
            ),
            compiler_params=pltpu.CompilerParams(
                dimension_semantics=("parallel", "arbitrary"),
                vmem_limit_bytes=vmem_limit),
        )(x2d, w1p, b1_2d, w2p, b2_2d)

    if m_pad != M:
        out2d = out2d[:M]
    return out2d.reshape(batch, seq, hidden)


# --------------------------------------------------------------------------
# Reference + tests
# --------------------------------------------------------------------------
def _reference_mlp(x2d, w1, b1, w2, b2):
    h = x2d.astype(jnp.float32) @ w1.astype(jnp.float32) + b1.astype(jnp.float32)
    h = _gelu_tanh(h)
    return h @ w2.astype(jnp.float32) + b2.astype(jnp.float32)


def _make_params(key, hidden, inter, dtype):
    k1, k2, k3, k4 = jax.random.split(key, 4)
    w1 = (jax.random.normal(k1, (hidden, inter), jnp.float32) * 0.02).astype(dtype)
    b1 = (jax.random.normal(k2, (inter,), jnp.float32) * 0.01).astype(dtype)
    w2 = (jax.random.normal(k3, (inter, hidden), jnp.float32) * 0.02).astype(dtype)
    b2 = (jax.random.normal(k4, (hidden,), jnp.float32) * 0.01).astype(dtype)
    return w1, b1, w2, b2


if __name__ == "__main__":
    root = jax.random.PRNGKey(0)

    # --- Check 1: small f32 config, resident-weight path (auto).
    batch, seq, hidden, inter = 2, 8, 32, 64
    kx, kp = jax.random.split(root)
    x = jax.random.normal(kx, (batch, seq, hidden), dtype=jnp.float32)
    w1, b1, w2, b2 = _make_params(kp, hidden, inter, jnp.float32)
    out = jax.block_until_ready(siglip_mlp(x, w1, b1, w2, b2))
    ref = _reference_mlp(x.reshape(-1, hidden), w1, b1, w2, b2).reshape(
        batch, seq, hidden).astype(x.dtype)
    assert out.shape == (batch, seq, hidden)
    assert jnp.allclose(out, ref, atol=1e-4, rtol=1e-4), "mismatch (check 1)"

    # --- Check 2: ragged rows (M=21) + forced streamed path with k-tiling
    #     and intermediate zero-padding (inter=192 -> 256 with tk=128).
    batch2, seq2, hidden2, inter2 = 3, 7, 32, 192
    kx2, kp2 = jax.random.split(jax.random.PRNGKey(1))
    x2 = jax.random.normal(kx2, (batch2, seq2, hidden2), dtype=jnp.float32)
    w1b, b1b, w2b, b2b = _make_params(kp2, hidden2, inter2, jnp.float32)
    out2 = jax.block_until_ready(
        siglip_mlp(x2, w1b, b1b, w2b, b2b,
                   block_m=16, block_k=128, weights_resident=False))
    ref2 = _reference_mlp(x2.reshape(-1, hidden2), w1b, b1b, w2b, b2b).reshape(
        batch2, seq2, hidden2).astype(x2.dtype)
    assert out2.shape == (batch2, seq2, hidden2)
    assert jnp.allclose(out2, ref2, atol=1e-4, rtol=1e-4), "mismatch (check 2)"

    # --- Check 3: bf16 weights/activations (native-dtype MXU, f32 accumulate).
    batch3, seq3, hidden3, inter3 = 2, 16, 128, 256
    kx3, kp3 = jax.random.split(jax.random.PRNGKey(2))
    x3 = jax.random.normal(kx3, (batch3, seq3, hidden3),
                           dtype=jnp.float32).astype(jnp.bfloat16)
    w1c, b1c, w2c, b2c = _make_params(kp3, hidden3, inter3, jnp.bfloat16)
    out3 = jax.block_until_ready(siglip_mlp(x3, w1c, b1c, w2c, b2c))
    ref3 = _reference_mlp(x3.reshape(-1, hidden3), w1c, b1c, w2c, b2c).reshape(
        batch3, seq3, hidden3)
    assert out3.shape == (batch3, seq3, hidden3)
    assert jnp.allclose(out3.astype(jnp.float32), ref3,
                        atol=1e-2, rtol=1e-1), "mismatch (check 3)"

    print("KERNEL_OK")
</pallas_src>

<mosaic_0001>
module attributes {stable_mosaic.version = 11 : i64} {
  func.func @_mlp_kernel_resident(%arg0: i32, %arg1: memref<8x32xf32, #tpu.memory_space<vmem>>, %arg2: memref<32x64xf32, #tpu.memory_space<vmem>>, %arg3: memref<1x64xf32, #tpu.memory_space<vmem>>, %arg4: memref<64x32xf32, #tpu.memory_space<vmem>>, %arg5: memref<1x32xf32, #tpu.memory_space<vmem>>, %arg6: memref<8x32xf32, #tpu.memory_space<vmem>>) attributes {dimension_semantics = [#tpu.dimension_semantics<parallel>], iteration_bounds = array<i64: 2>, scalar_prefetch = 0 : i64, scratch_operands = 0 : i64, tpu.core_type = #tpu.core_type<tc>, window_params = [{transform_indices = @transform_0, window_bounds = array<i64: 8, 32>}, {pipeline_mode = #tpu.pipeline_mode<synchronous>, transform_indices = @transform_1, window_bounds = array<i64: 32, 64>}, {pipeline_mode = #tpu.pipeline_mode<synchronous>, transform_indices = @transform_2, window_bounds = array<i64: 1, 64>}, {pipeline_mode = #tpu.pipeline_mode<synchronous>, transform_indices = @transform_3, window_bounds = array<i64: 64, 32>}, {pipeline_mode = #tpu.pipeline_mode<synchronous>, transform_indices = @transform_4, window_bounds = array<i64: 1, 32>}, {transform_indices = @transform_5, window_bounds = array<i64: 8, 32>}]} {
    %c0 = arith.constant 0 : index
    %c0_0 = arith.constant 0 : index
    %0 = vector.load %arg1[%c0, %c0_0] : memref<8x32xf32, #tpu.memory_space<vmem>>, vector<8x32xf32>
    %c0_1 = arith.constant 0 : index
    %c0_2 = arith.constant 0 : index
    %1 = vector.load %arg2[%c0_1, %c0_2] : memref<32x64xf32, #tpu.memory_space<vmem>>, vector<32x64xf32>
    %cst = arith.constant dense<0.000000e+00> : vector<8x64xf32>
    %2 = tpu.matmul %0, %1, %cst {dimension_numbers = #tpu.dot_dimension_numbers<[1], [0], [0], [1], [0, 0, 1, 1], [], []>} : vector<8x32xf32>, vector<32x64xf32>, vector<8x64xf32> -> vector<8x64xf32>
    %c0_3 = arith.constant 0 : index
    %c0_4 = arith.constant 0 : index
    %3 = vector.load %arg3[%c0_3, %c0_4] : memref<1x64xf32, #tpu.memory_space<vmem>>, vector<1x64xf32>
    %4 = vector.broadcast %3 : vector<1x64xf32> to vector<8x64xf32>
    %5 = arith.addf %2, %4 : vector<8x64xf32>
    %6 = arith.mulf %5, %5 : vector<8x64xf32>
    %7 = arith.mulf %6, %5 : vector<8x64xf32>
    %cst_5 = arith.constant 4.471500e-02 : f32
    %8 = vector.broadcast %cst_5 : f32 to vector<8x64xf32>
    %9 = arith.mulf %8, %7 : vector<8x64xf32>
    %10 = arith.addf %5, %9 : vector<8x64xf32>
    %cst_6 = arith.constant 1.59576917 : f32
    %11 = vector.broadcast %cst_6 : f32 to vector<8x64xf32>
    %12 = arith.mulf %11, %10 : vector<8x64xf32>
    %13 = arith.negf %12 : vector<8x64xf32>
    %14 = math.exp %13 : vector<8x64xf32>
    %cst_7 = arith.constant 1.000000e+00 : f32
    %15 = vector.broadcast %cst_7 : f32 to vector<8x64xf32>
    %16 = arith.addf %15, %14 : vector<8x64xf32>
    %17 = arith.divf %15, %16 : vector<8x64xf32>
    %18 = arith.mulf %5, %17 : vector<8x64xf32>
    %c0_8 = arith.constant 0 : index
    %c0_9 = arith.constant 0 : index
    %19 = vector.load %arg4[%c0_8, %c0_9] : memref<64x32xf32, #tpu.memory_space<vmem>>, vector<64x32xf32>
    %cst_10 = arith.constant dense<0.000000e+00> : vector<8x32xf32>
    %20 = tpu.matmul %18, %19, %cst_10 {dimension_numbers = #tpu.dot_dimension_numbers<[1], [0], [0], [1], [0, 0, 1, 1], [], []>} : vector<8x64xf32>, vector<64x32xf32>, vector<8x32xf32> -> vector<8x32xf32>
    %c0_11 = arith.constant 0 : index
    %c0_12 = arith.constant 0 : index
    %21 = vector.load %arg5[%c0_11, %c0_12] : memref<1x32xf32, #tpu.memory_space<vmem>>, vector<1x32xf32>
    %22 = vector.broadcast %21 : vector<1x32xf32> to vector<8x32xf32>
    %23 = arith.addf %20, %22 : vector<8x32xf32>
    %c0_13 = arith.constant 0 : index
    %c0_14 = arith.constant 0 : index
    %24 = vector.load %arg6[%c0_13, %c0_14] : memref<8x32xf32, #tpu.memory_space<vmem>>, vector<8x32xf32>
    tpu.vector_store %arg6[%c0_13, %c0_14], %23 {strides = array<i32>} : memref<8x32xf32, #tpu.memory_space<vmem>>, vector<8x32xf32>,
    return
  }
  func.func @transform_0(%arg0: i32) -> (i32, i32) {
    %c0_i32 = arith.constant 0 : i32
    %c0_i32_0 = arith.constant 0 : i32
    return %arg0, %c0_i32 : i32, i32
  }
  func.func @transform_1(%arg0: i32) -> (i32, i32) {
    %c0_i32 = arith.constant 0 : i32
    %c0_i32_0 = arith.constant 0 : i32
    %c0_i32_1 = arith.constant 0 : i32
    return %c0_i32, %c0_i32_0 : i32, i32
  }
  func.func @transform_2(%arg0: i32) -> (i32, i32) {
    %c0_i32 = arith.constant 0 : i32
    %c0_i32_0 = arith.constant 0 : i32
    %c0_i32_1 = arith.constant 0 : i32
    return %c0_i32, %c0_i32_0 : i32, i32
  }
  func.func @transform_3(%arg0: i32) -> (i32, i32) {
    %c0_i32 = arith.constant 0 : i32
    %c0_i32_0 = arith.constant 0 : i32
    %c0_i32_1 = arith.constant 0 : i32
    return %c0_i32, %c0_i32_0 : i32, i32
  }
  func.func @transform_4(%arg0: i32) -> (i32, i32) {
    %c0_i32 = arith.constant 0 : i32
    %c0_i32_0 = arith.constant 0 : i32
    %c0_i32_1 = arith.constant 0 : i32
    return %c0_i32, %c0_i32_0 : i32, i32
  }
  func.func @transform_5(%arg0: i32) -> (i32, i32) {
    %c0_i32 = arith.constant 0 : i32
    %c0_i32_0 = arith.constant 0 : i32
    return %arg0, %c0_i32 : i32, i32
  }
}

</mosaic_0001>

<llo_original>
// kernel: siglip_mlp.1
$region0: #{siglip_mlp.1}
  #allocation0 [shape = 'u32[]', space=smem, size = 0x4, offset = 0x4, fixed_abs, tag = 'smem constant byte address 0x4 - core index']
  #allocation1 [shape = 'u32[144,128]{1,0:T(1,128)}', space=vmem, size = 0x12000, scoped, tag = 'internal scratch']
  %s0 = inlined_call_operand.vmem [shape: f32[16,32], index: 0, kind: input, shape index: {}]
  %s1 = inlined_call_operand.vmem [shape: f32[32,64], index: 1, kind: input, shape index: {}]
  %s2 = inlined_call_operand.vmem [shape: f32[1,64], index: 2, kind: input, shape index: {}]
  %s3 = inlined_call_operand.vmem [shape: f32[64,32], index: 3, kind: input, shape index: {}]
  %s4 = inlined_call_operand.vmem [shape: f32[1,32], index: 4, kind: input, shape index: {}]
  %s5 = inlined_call_operand.hbm [shape: f32[16,32], index: 5, kind: output, shape index: {}]
  %s6 = sld [smem:[#allocation0]]
  $region53: #{siglip_mlp.1} parent=0
    _
  %s8 = ssub.s32 1, %s6
  %s9 = scalar_select 0, %s8, %s6
  $region1: #{siglip_mlp.1} parent=0
    #allocation2 [shape = 'u8[8192]{0}', space=vmem, size = 0x2000, scoped, tag = 'output window, operand 0']
    #allocation3 [shape = 's32[2]{0}', space=sflag, size = 0x8, scoped, tag = 'scoped memory for siglip_mlp.1']
    %10 = vsyncpa [#allocation3], 0
    %s11 = scalar_lea.sflag [#allocation3], 1
    %12 = vsyncpa %s11, 0
    loop: start=0, step=1, limit=4
    $region2: #{siglip_mlp.1} parent=1 // loop_pre_header
      _
    $region3: #{siglip_mlp.1} parent=1 // loop_header
      %s14 = sphi 0, %s18
      %p15 = scmp.ge.s32.totalorder %s14, 4
      %s24 = sphi 0, %s26
      %s27 = sphi 0, %s24
      %s28 = sphi 0, %s27
      %s44 = sphi 0, %s28
      %s48 = sphi 0, %s48
      %s50 = sphi 0, %s48
      %s51 = sphi 0, %s50
      %s65 = sphi 0, %s51
      %s69 = sphi 0, %s69
      %s71 = sphi 0, %s69
      %s72 = sphi 0, %s71
      %s86 = sphi 0, %s72
      %s90 = sphi 0, %s90
      %s92 = sphi 0, %s90
      %s93 = sphi 0, %s92
      %s107 = sphi 0, %s93
      %s111 = sphi 0, %s111
      %s113 = sphi 0, %s111
      %s114 = sphi 0, %s113
      %s128 = sphi 0, %s114
      %s134 = sphi 0, %s136
      %s137 = sphi 0, %s134
      %s138 = sphi 0, %s137
      %s154 = sphi 0, %s138
    $region4: #{siglip_mlp.1} parent=1 // loop_header_branch
      %17 = sbr.rel (%p15) target = $region8
    $region5: #{siglip_mlp.1} parent=1 // loop_body
      %s19 = ssub.s32 %s14, 1
      %s20 = ssub.s32 %s14, 2
      %s21 = sadd.s32 %s14, 1
      %s22 = ssub.s32 %s14, %s21
      %p23 = scmp.eq.s32.totalorder %s22, 0
      %s25 = sadd.s32 %s24, 1
      %s26 = scalar_select %p23, %s24, %s25
      %p29 = pneg %p23
      %p30 = scmp.eq.s32.totalorder %s14, 1
      %p31 = por %p29, %p30
      %p32 = scmp.ne.s32.totalorder %s24, %s27
      %p33 = scmp.eq.s32.totalorder %s14, 0
      %p34 = por %p32, %p33
      %p35 = scmp.ne.s32.totalorder %s24, %s27
      %p36 = scmp.eq.s32.totalorder %s19, 1
      %p37 = por %p35, %p36
      %p38 = scmp.ne.s32.totalorder %s27, %s28
      %p39 = scmp.eq.s32.totalorder %s19, 0
      %p40 = por %p38, %p39
      %p41 = scmp.ne.s32.totalorder %s27, %s28
      %p42 = scmp.eq.s32.totalorder %s20, 1
      %p43 = por %p41, %p42
      %p45 = scmp.ne.s32.totalorder %s28, %s44
      %p46 = scmp.eq.s32.totalorder %s20, 0
      %p47 = por %p45, %p46
      %s49 = sadd.s32 %s48, 1
      %p52 = scmp.eq.s32.totalorder %s14, 1
      %p53 = scmp.ne.s32.totalorder %s48, %s50
      %p54 = scmp.eq.s32.totalorder %s14, 0
      %p55 = por %p53, %p54
      %p56 = scmp.ne.s32.totalorder %s48, %s50
      %p57 = scmp.eq.s32.totalorder %s19, 1
      %p58 = por %p56, %p57
      %p59 = scmp.ne.s32.totalorder %s50, %s51
      %p60 = scmp.eq.s32.totalorder %s19, 0
      %p61 = por %p59, %p60
      %p62 = scmp.ne.s32.totalorder %s50, %s51
      %p63 = scmp.eq.s32.totalorder %s20, 1
      %p64 = por %p62, %p63
      %p66 = scmp.ne.s32.totalorder %s51, %s65
      %p67 = scmp.eq.s32.totalorder %s20, 0
      %p68 = por %p66, %p67
      %s70 = sadd.s32 %s69, 1
      %p73 = scmp.eq.s32.totalorder %s14, 1
      %p74 = scmp.ne.s32.totalorder %s69, %s71
      %p75 = scmp.eq.s32.totalorder %s14, 0
      %p76 = por %p74, %p75
      %p77 = scmp.ne.s32.totalorder %s69, %s71
      %p78 = scmp.eq.s32.totalorder %s19, 1
      %p79 = por %p77, %p78
      %p80 = scmp.ne.s32.totalorder %s71, %s72
      %p81 = scmp.eq.s32.totalorder %s19, 0
      %p82 = por %p80, %p81
      %p83 = scmp.ne.s32.totalorder %s71, %s72
      %p84 = scmp.eq.s32.totalorder %s20, 1
      %p85 = por %p83, %p84
      %p87 = scmp.ne.s32.totalorder %s72, %s86
      %p88 = scmp.eq.s32.totalorder %s20, 0
      %p89 = por %p87, %p88
      %s91 = sadd.s32 %s90, 1
      %p94 = scmp.eq.s32.totalorder %s14, 1
      %p95 = scmp.ne.s32.totalorder %s90, %s92
      %p96 = scmp.eq.s32.totalorder %s14, 0
      %p97 = por %p95, %p96
      %p98 = scmp.ne.s32.totalorder %s90, %s92
      %p99 = scmp.eq.s32.totalorder %s19, 1
      %p100 = por %p98, %p99
      %p101 = scmp.ne.s32.totalorder %s92, %s93
      %p102 = scmp.eq.s32.totalorder %s19, 0
      %p103 = por %p101, %p102
      %p104 = scmp.ne.s32.totalorder %s92, %s93
      %p105 = scmp.eq.s32.totalorder %s20, 1
      %p106 = por %p104, %p105
      %p108 = scmp.ne.s32.totalorder %s93, %s107
      %p109 = scmp.eq.s32.totalorder %s20, 0
      %p110 = por %p108, %p109
      %s112 = sadd.s32 %s111, 1
      %p115 = scmp.eq.s32.totalorder %s14, 1
      %p116 = scmp.ne.s32.totalorder %s111, %s113
      %p117 = scmp.eq.s32.totalorder %s14, 0
      %p118 = por %p116, %p117
      %p119 = scmp.ne.s32.totalorder %s111, %s113
      %p120 = scmp.eq.s32.totalorder %s19, 1
      %p121 = por %p119, %p120
      %p122 = scmp.ne.s32.totalorder %s113, %s114
      %p123 = scmp.eq.s32.totalorder %s19, 0
      %p124 = por %p122, %p123
      %p125 = scmp.ne.s32.totalorder %s113, %s114
      %p126 = scmp.eq.s32.totalorder %s20, 1
      %p127 = por %p125, %p126
      %p129 = scmp.ne.s32.totalorder %s114, %s128
      %p130 = scmp.eq.s32.totalorder %s20, 0
      %p131 = por %p129, %p130
      %s132 = ssub.s32 %s14, %s21
      %p133 = scmp.eq.s32.totalorder %s132, 0
      %s135 = sadd.s32 %s134, 1
      %s136 = scalar_select %p133, %s134, %s135
      %p139 = pneg %p133
      %p140 = scmp.eq.s32.totalorder %s14, 1
      %p141 = por %p139, %p140
      %p142 = scmp.ne.s32.totalorder %s134, %s137
      %p143 = scmp.eq.s32.totalorder %s14, 0
      %p144 = por %p142, %p143
      %p145 = scmp.ne.s32.totalorder %s134, %s137
      %p146 = scmp.eq.s32.totalorder %s19, 1
      %p147 = por %p145, %p146
      %p148 = scmp.ne.s32.totalorder %s137, %s138
      %p149 = scmp.eq.s32.totalorder %s19, 0
      %p150 = por %p148, %p149
      %p151 = scmp.ne.s32.totalorder %s137, %s138
      %p152 = scmp.eq.s32.totalorder %s20, 1
      %p153 = por %p151, %p152
      %p155 = scmp.ne.s32.totalorder %s138, %s154
      %p156 = scmp.eq.s32.totalorder %s20, 0
      %p157 = por %p155, %p156
      %p158 = scmp.le.s32.totalorder 1, %s14
      %p159 = scmp.lt.s32.totalorder %s14, 3
      %p160 = pnand %p158, %p159
      %p161 = pneg %p160
      // Predicated region
      $region9: #{siglip_mlp.1} parent=5 // pred_check
        _
      $region10: #{siglip_mlp.1} parent=5 // pred_check_branch
        %163 = sbr.rel (%p160) target = $region12
      $region11: #{siglip_mlp.1} parent=5 // pred_region
        %s164 = ssub.s32 %s14, 1
        // Predicated region
        $region13: #{siglip_mlp.1} parent=11 // pred_check
          %p165 = pneg %p61
        $region14: #{siglip_mlp.1} parent=11 // pred_check_branch
          %167 = sbr.rel (%p165) target = $region16
        $region15: #{siglip_mlp.1} parent=11 // pred_region
          _
        $region16: #{siglip_mlp.1} parent=11 // pred_fallthru
          _
        // Predicated region
        $region17: #{siglip_mlp.1} parent=11 // pred_check
          %p168 = pneg %p82
        $region18: #{siglip_mlp.1} parent=11 // pred_check_branch
          %170 = sbr.rel (%p168) target = $region20
        $region19: #{siglip_mlp.1} parent=11 // pred_region
          _
        $region20: #{siglip_mlp.1} parent=11 // pred_fallthru
          _
        // Predicated region
        $region21: #{siglip_mlp.1} parent=11 // pred_check
          %p171 = pneg %p103
        $region22: #{siglip_mlp.1} parent=11 // pred_check_branch
          %173 = sbr.rel (%p171) target = $region24
        $region23: #{siglip_mlp.1} parent=11 // pred_region
          _
        $region24: #{siglip_mlp.1} parent=11 // pred_fallthru
          _
        // Predicated region
        $region25: #{siglip_mlp.1} parent=11 // pred_check
          %p174 = pneg %p124
        $region26: #{siglip_mlp.1} parent=11 // pred_check_branch
          %176 = sbr.rel (%p174) target = $region28
        $region27: #{siglip_mlp.1} parent=11 // pred_region
          _
        $region28: #{siglip_mlp.1} parent=11 // pred_fallthru
          _
      $region12: #{siglip_mlp.1} parent=5 // pred_fallthru
        _
      %p177 = scmp.lt.s32.totalorder %s14, 2
      // Predicated region
      $region29: #{siglip_mlp.1} parent=5 // pred_check
        %p178 = pneg %p177
      $region30: #{siglip_mlp.1} parent=5 // pred_check_branch
        %180 = sbr.rel (%p178) target = $region32
      $region31: #{siglip_mlp.1} parent=5 // pred_region
        // Predicated region
        $region33: #{siglip_mlp.1} parent=31 // pred_check
          %p181 = pneg %p34
        $region34: #{siglip_mlp.1} parent=31 // pred_check_branch
          %183 = sbr.rel (%p181) target = $region36
        $region35: #{siglip_mlp.1} parent=31 // pred_region
          %p184 = scmp.lt.s32.totalorder %s14, 1
          %s185 = scalar_select %p184, %s14, 1
          %s186 = smul.addr %s185, 8
          %s187 = scalar_lea.vmem %s0, %s186
        $region36: #{siglip_mlp.1} parent=31 // pred_fallthru
          _
      $region32: #{siglip_mlp.1} parent=5 // pred_fallthru
        _
      %p188 = scmp.le.s32.totalorder 1, %s14
      %p189 = scmp.lt.s32.totalorder %s14, 3
      %p190 = pnand %p188, %p189
      %p191 = pneg %p190
      // Predicated region
      $region37: #{siglip_mlp.1} parent=5 // pred_check
        _
      $region38: #{siglip_mlp.1} parent=5 // pred_check_branch
        %193 = sbr.rel (%p190) target = $region40
      $region39: #{siglip_mlp.1} parent=5 // pred_region
        %s194 = ssub.s32 %s14, 1
        %p195 = scmp.lt.s32.totalorder %s19, 1
        %s196 = scalar_select %p195, %s19, 1
        %s197 = smul.addr %s196, 8
        %s198 = scalar_lea.vmem %s0, %s197
        %p199 = pneg %p40
        %p200 = pneg %p37
        %p201 = pneg %p61
        %p202 = pneg %p58
        %p203 = pneg %p82
        %p204 = pneg %p79
        %p205 = pneg %p103
        %p206 = pneg %p100
        %p207 = pneg %p124
        %p208 = pneg %p121
        %p209 = pneg %p150
        %p210 = pneg %p147
        %s211 = sand.u32 %s137, 1
        %s212 = scalar_lea.sflag [#allocation3], %s211
        %s213 = sand.u32 %s137, 1
        %s214 = smul.addr %s213, 8
        %s215 = scalar_lea.vmem [#allocation2], %s214
        %p216 = scmp.lt.s32.totalorder %s19, 1
        %s217 = scalar_select %p216, %s19, 1
        %s218 = smul.addr %s217, 8
        %s219 = scalar_lea.vmem %s0, %s218
        %v220 = vld [vmem:[%s219] sm:$0xff]
        %v221 = vld [vmem:[%s1] sm:$0xff]
        %v222 = vld [vmem:[%s1 + $0x8] sm:$0xff]
        %v223 = vld [vmem:[%s1 + $0x10] sm:$0xff]
        %v224 = vld [vmem:[%s1 + $0x18] sm:$0xff]
        %v225 = vld [vmem:[%s2] sm:$0x1]
        %v227 = vlaneseq
        %v228 = vshrl.u32 %v227, 7
        %v229 = vsub.s32 0, %v228
        %v230 = vrot.slane %v225, %v229
        %vm232 = vcmask 261120
        %v234 = vsel %vm232, %v220, 0
        %236 = vmatprep.subr.mxu0 0.0
        %237 = vmatpush1.msra.mxu0 %v221
        %238 = vmatprep.subr.mxu0 0.0
        %239 = vmatpush1.msra.mxu0 %v222
        %240 = vmatprep.subr.mxu0 0.0
        %241 = vmatpush1.msra.mxu0 %v223
        %242 = vmatprep.subr.mxu0 0.0
        %243 = vmatpush1.msra.mxu0 %v224
        %244 = vmatprep.subr.mxu0 0.0
        %245 = vmatpush1.msra.mxu0 0.0
        %246 = vmatprep.subr.mxu0 0.0
        %247 = vmatpush1.msra.mxu0 0.0
        %248 = vmatprep.subr.mxu0 0.0
        %249 = vmatpush1.msra.mxu0 0.0
        %250 = vmatprep.subr.mxu0 0.0
        %251 = vmatpush1.msra.mxu0 0.0
        %252 = vmatprep.subr.mxu0 0.0
        %253 = vmatpush1.msra.mxu0 0.0
        %254 = vmatprep.subr.mxu0 0.0
        %255 = vmatpush1.msra.mxu0 0.0
        %256 = vmatprep.subr.mxu0 0.0
        %257 = vmatpush1.msra.mxu0 0.0
        %258 = vmatprep.subr.mxu0 0.0
        %259 = vmatpush1.msra.mxu0 0.0
        %260 = vmatprep.subr.mxu0 0.0
        %261 = vmatpush1.msra.mxu0 0.0
        %262 = vmatprep.subr.mxu0 0.0
        %263 = vmatpush1.msra.mxu0 0.0
        %264 = vmatprep.subr.mxu0 0.0
        %265 = vmatpush1.msra.mxu0 0.0
        %266 = vmatprep.subr.mxu0 0.0
        %267 = vmatpush1.msra.mxu0 0.0
        %268 = vmatprep.subr.mxu0 0.0
        %269 = vmatpush1.msra.mxu0 0.0
        %270 = vmatprep.subr.mxu0 0.0
        %271 = vmatpush1.msra.mxu0 0.0
        %272 = vmatprep.subr.mxu0 0.0
        %273 = vmatpush1.msra.mxu0 0.0
        %274 = vmatprep.subr.mxu0 0.0
        %275 = vmatpush1.msra.mxu0 0.0
        %276 = vmatprep.subr.mxu0 0.0
        %277 = vmatpush1.msra.mxu0 0.0
        %278 = vmatprep.subr.mxu0 0.0
        %279 = vmatpush1.msra.mxu0 0.0
        %280 = vmatprep.subr.mxu0 0.0
        %281 = vmatpush1.msra.mxu0 0.0
        %282 = vmatprep.subr.mxu0 0.0
        %283 = vmatpush1.msra.mxu0 0.0
        %284 = vmatprep.subr.mxu0 0.0
        %285 = vmatpush1.msra.mxu0 0.0
        %286 = vmatprep.subr.mxu0 0.0
        %287 = vmatpush1.msra.mxu0 0.0
        %288 = vmatprep.subr.mxu0 0.0
        %289 = vmatpush1.msra.mxu0 0.0
        %290 = vmatprep.subr.mxu0 0.0
        %291 = vmatpush1.msra.mxu0 0.0
        %292 = vmatprep.subr.mxu0 0.0
        %293 = vmatpush1.msra.mxu0 0.0
        %294 = vmatprep.subr.mxu0 0.0
        %295 = vmatpush1.msra.mxu0 0.0
        %296 = vmatprep.subr.mxu0 0.0
        %297 = vmatpush1.msra.mxu0 0.0
        %298 = vmatprep.subr.mxu0 0.0
        %299 = vmatpush1.msra.mxu0 0.0
        %300 = vmatprep.mubr.f32.mxu0 0.0
        %301 = vmatmul.mubr.f32.gmra.mrb[0].mxu0 %v234
        %v302 = vpop.f32.mrb[0].mxu0
        %v303 = vadd.f32 %v230, %v302
        %v304 = vpop.f32.mrb[0].mxu0
        %305 = vdwg.mxu0
        %v306 = vmul.f32 %v303, %v303
        %v307 = vmul.f32 %v306, %v303
        %v308 = vmul.f32 %v307, 0.044715
        %v309 = vadd.f32 %v303, %v308
        %v310 = vmul.f32 %v309, 1.5957692
        %v311 = vxor.u32 %v310, 2147483648
        %v312 = vmul.f32 %v311, 1.442695
        %v313 = vpow.pop %v312
        %v314 = vadd.f32 %v313, 1.0
        %v315 = vrcp.pop %v314
        %v316 = vmul.f32 1.0, %v315
        %v317 = vmul.f32 %v303, %v316
        %v318 = vld [vmem:[%s3] sm:$0xff]
        %v319 = vld [vmem:[%s3 + $0x8] sm:$0xff]
        %v320 = vld [vmem:[%s3 + $0x10] sm:$0xff]
        %v321 = vld [vmem:[%s3 + $0x18] sm:$0xff]
        %v322 = vld [vmem:[%s3 + $0x20] sm:$0xff]
        %v323 = vld [vmem:[%s3 + $0x28] sm:$0xff]
        %v324 = vld [vmem:[%s3 + $0x30] sm:$0xff]
        %v325 = vld [vmem:[%s3 + $0x38] sm:$0xff]
        %v326 = vld [vmem:[%s4] sm:$0x1]
        %v328 = vlaneseq
        %v329 = vshrl.u32 %v328, 7
        %v330 = vsub.s32 0, %v329
        %v331 = vrot.slane %v326, %v330
        %vm333 = vcmask 523264
        %v335 = vsel %vm333, %v317, 0
        %337 = vmatprep.subr.mxu0 0.0
        %338 = vmatpush1.msra.mxu0 %v318
        %339 = vmatprep.subr.mxu0 0.0
        %340 = vmatpush1.msra.mxu0 %v319
        %341 = vmatprep.subr.mxu0 0.0
        %342 = vmatpush1.msra.mxu0 %v320
        %343 = vmatprep.subr.mxu0 0.0
        %344 = vmatpush1.msra.mxu0 %v321
        %345 = vmatprep.subr.mxu0 0.0
        %346 = vmatpush1.msra.mxu0 %v322
        %347 = vmatprep.subr.mxu0 0.0
        %348 = vmatpush1.msra.mxu0 %v323
        %349 = vmatprep.subr.mxu0 0.0
        %350 = vmatpush1.msra.mxu0 %v324
        %351 = vmatprep.subr.mxu0 0.0
        %352 = vmatpush1.msra.mxu0 %v325
        %353 = vmatprep.subr.mxu0 0.0
        %354 = vmatpush1.msra.mxu0 0.0
        %355 = vmatprep.subr.mxu0 0.0
        %356 = vmatpush1.msra.mxu0 0.0
        %357 = vmatprep.subr.mxu0 0.0
        %358 = vmatpush1.msra.mxu0 0.0
        %359 = vmatprep.subr.mxu0 0.0
        %360 = vmatpush1.msra.mxu0 0.0
        %361 = vmatprep.subr.mxu0 0.0
        %362 = vmatpush1.msra.mxu0 0.0
        %363 = vmatprep.subr.mxu0 0.0
        %364 = vmatpush1.msra.mxu0 0.0
        %365 = vmatprep.subr.mxu0 0.0
        %366 = vmatpush1.msra.mxu0 0.0
        %367 = vmatprep.subr.mxu0 0.0
        %368 = vmatpush1.msra.mxu0 0.0
        %369 = vmatprep.subr.mxu0 0.0
        %370 = vmatpush1.msra.mxu0 0.0
        %371 = vmatprep.subr.mxu0 0.0
        %372 = vmatpush1.msra.mxu0 0.0
        %373 = vmatprep.subr.mxu0 0.0
        %374 = vmatpush1.msra.mxu0 0.0
        %375 = vmatprep.subr.mxu0 0.0
        %376 = vmatpush1.msra.mxu0 0.0
        %377 = vmatprep.subr.mxu0 0.0
        %378 = vmatpush1.msra.mxu0 0.0
        %379 = vmatprep.subr.mxu0 0.0
        %380 = vmatpush1.msra.mxu0 0.0
        %381 = vmatprep.subr.mxu0 0.0
        %382 = vmatpush1.msra.mxu0 0.0
        %383 = vmatprep.subr.mxu0 0.0
        %384 = vmatpush1.msra.mxu0 0.0
        %385 = vmatprep.subr.mxu0 0.0
        %386 = vmatpush1.msra.mxu0 0.0
        %387 = vmatprep.subr.mxu0 0.0
        %388 = vmatpush1.msra.mxu0 0.0
        %389 = vmatprep.subr.mxu0 0.0
        %390 = vmatpush1.msra.mxu0 0.0
        %391 = vmatprep.subr.mxu0 0.0
        %392 = vmatpush1.msra.mxu0 0.0
        %393 = vmatprep.subr.mxu0 0.0
        %394 = vmatpush1.msra.mxu0 0.0
        %395 = vmatprep.subr.mxu0 0.0
        %396 = vmatpush1.msra.mxu0 0.0
        %397 = vmatprep.subr.mxu0 0.0
        %398 = vmatpush1.msra.mxu0 0.0
        %399 = vmatprep.subr.mxu0 0.0
        %400 = vmatpush1.msra.mxu0 0.0
        %401 = vmatprep.mubr.f32.mxu0 0.0
        %402 = vmatmul.mubr.f32.gmra.mrb[0].mxu0 %v335
        %v403 = vpop.f32.mrb[0].mxu0
        %v404 = vadd.f32 %v331, %v403
        %v405 = vpop.f32.mrb[0].mxu0
        %406 = vdwg.mxu0
        %407 = vst.msk [vmem:[%s215] sm:$0xff] %vm232, %v404
        %s408 = sand.u32 %s137, 1
        %s409 = scalar_lea.sflag [#allocation3], %s408
        %s410 = sand.u32 %s137, 1
        %s411 = smul.addr %s410, 8
        %s412 = scalar_lea.vmem [#allocation2], %s411
        // Predicated region
        $region41: #{siglip_mlp.1} parent=39 // pred_check
          %p413 = pneg %p147
        $region42: #{siglip_mlp.1} parent=39 // pred_check_branch
          %415 = sbr.rel (%p413) target = $region44
        $region43: #{siglip_mlp.1} parent=39 // pred_region
          %s417 = ssub.s32 128, 128
          %418 = vsyncadd %s409, %s417
          %s419 = smul.addr %s19, 128
          %s420 = scalar_lea.hbm %s5, %s419
          %s422 = sshll.u32 %s412, 4
          %s423 = int_to_ptr.vmem [resolvable:$true] %s422
          %425 = dma.vmem_to_hbm [thread:$0]  %s423, 128, %s420, %s409
        $region44: #{siglip_mlp.1} parent=39 // pred_fallthru
          _
      $region40: #{siglip_mlp.1} parent=5 // pred_fallthru
        _
      %p426 = scmp.le.s32.totalorder 2, %s14
      // Predicated region
      $region45: #{siglip_mlp.1} parent=5 // pred_check
        %p427 = pneg %p426
      $region46: #{siglip_mlp.1} parent=5 // pred_check_branch
        %429 = sbr.rel (%p427) target = $region48
      $region47: #{siglip_mlp.1} parent=5 // pred_region
        %s430 = ssub.s32 %s14, 2
        // Predicated region
        $region49: #{siglip_mlp.1} parent=47 // pred_check
          %p431 = pneg %p153
        $region50: #{siglip_mlp.1} parent=47 // pred_check_branch
          %433 = sbr.rel (%p431) target = $region52
        $region51: #{siglip_mlp.1} parent=47 // pred_region
          %s434 = sand.u32 %s138, 1
          %s435 = scalar_lea.sflag [#allocation3], %s434
          %s436 = sand.u32 %s138, 1
          %s437 = smul.addr %s436, 8
          %s438 = scalar_lea.vmem [#allocation2], %s437
          %439 = dma.done %s435, 128
        $region52: #{siglip_mlp.1} parent=47 // pred_fallthru
          _
      $region48: #{siglip_mlp.1} parent=5 // pred_fallthru
        _
    $region6: #{siglip_mlp.1} parent=1 // loop_footer
      %s18 = sadd.s32 1, %s14
    $region7: #{siglip_mlp.1} parent=1 // loop_footer_branch
      %13 = sbr.rel target = $region3
    $region8: #{siglip_mlp.1} parent=1 // loop_exit
      _
    %440 = vsyncpa [#allocation3], 1
    %s441 = scalar_lea.sflag [#allocation3], 1
    %442 = vsyncpa %s441, 1

</llo_original>
